<compile_context>
chip_gen: v6e
topology: v6e:2x2x1
jax: 0.10.0
libtpu: 0.0.40
codegen_flags: <defaults>
</compile_context>

<pallas_src>
import jax
import jax.numpy as jnp
import numpy as np
from jax.experimental import pallas as pl
from jax.experimental.pallas import tpu as pltpu

BN_EPS = 1e-5
NEG_SLOPE = 0.2


def _round_up(n, m):
    return (n + m - 1) // m * m


# ----------------------------- Pallas kernel --------------------------------
def _build_kernel(layout):
    D0p, L0p, L1p, H2p, O2p = layout["padded_dims"]
    ow1, ow2, owh1, owh2 = layout["w_offsets"]
    ob = layout["b_offset"]

    def bn_norm(h):
        # training-mode BatchNorm1d statistics, one pass (clamped variance:
        # E[h^2] - mean^2 is cancellation-prone).
        inv_b = 1.0 / h.shape[0]
        s1 = jnp.sum(h, axis=0, keepdims=True)
        s2 = jnp.sum(h * h, axis=0, keepdims=True)
        mean = s1 * inv_b
        var = jnp.maximum(s2 * inv_b - mean * mean, 0.0)
        return (h - mean) * jax.lax.rsqrt(var + BN_EPS)

    def lrelu(h):
        # valid because NEG_SLOPE < 1
        return jnp.maximum(h, NEG_SLOPE * h)

    def kernel(x_ref, p_ref, out_ref):
        x = x_ref[...]                                            # (B, D0p), full-lane

        # trunk layer 1: BN (affine folded into W/b) -> Linear -> LeakyReLU
        h = lrelu(
            jnp.dot(bn_norm(x), p_ref[ow1:ow1 + D0p, 0:L0p],
                    preferred_element_type=jnp.float32)
            + p_ref[ob + 0:ob + 1, 0:L0p])

        # trunk layer 2
        h = lrelu(
            jnp.dot(bn_norm(h), p_ref[ow2:ow2 + L0p, 0:L1p],
                    preferred_element_type=jnp.float32)
            + p_ref[ob + 1:ob + 2, 0:L1p])

        # fused mu/sigma heads: shared normalization, concatenated first-layer
        # weights, block-diagonal second layer.
        hh = lrelu(
            jnp.dot(bn_norm(h), p_ref[owh1:owh1 + L1p, 0:H2p],
                    preferred_element_type=jnp.float32)
            + p_ref[ob + 2:ob + 3, 0:H2p])
        out_ref[...] = (
            jnp.dot(hh, p_ref[owh2:owh2 + H2p, 0:O2p],
                    preferred_element_type=jnp.float32)
            + p_ref[ob + 3:ob + 4, 0:O2p])

    return kernel


# ------------------ one-time host-side parameter packing ---------------------
def pack_params(params, in_dim, latent_dims, out_dim):
    """Fold BN affines into the Linears, fuse the mu/sigma heads, pad every layer
    width to a multiple of 128 lanes, and pack everything into one f32 slab.
    Runs ONCE at parameter-creation time (numpy, outside jit)."""
    D0 = in_dim
    L0, L1, L2 = latent_dims
    OUT = out_dim
    p = {k: np.asarray(v, np.float32) for k, v in params.items()}

    def fold(gamma, beta, w, b):
        # BN affine followed by Linear: (n*gamma + beta) @ W + b == n @ W' + b'
        w_f = gamma.reshape(-1, 1) * w
        b_f = beta.reshape(1, -1) @ w + b
        return w_f, b_f

    w1, b1 = fold(p["g1"], p["be1"], p["w1"], p["b1"])
    w2, b2 = fold(p["g2"], p["be2"], p["w2"], p["b2"])
    wm1, bm1 = fold(p["gmu"], p["bemu"], p["wmu1"], p["bmu1"])
    ws1, bs1 = fold(p["gsg"], p["besg"], p["wsg1"], p["bsg1"])

    # fuse the heads: concatenated first layer, block-diagonal second layer.
    wh1 = np.concatenate([wm1, ws1], axis=1)                       # (L1, 2*L2)
    bh1 = np.concatenate([bm1, bs1], axis=1)                       # (1, 2*L2)
    zero = np.zeros((L2, OUT), np.float32)
    wh2 = np.block([[p["wmu2"], zero], [zero, p["wsg2"]]])         # (2*L2, 2*OUT)
    bh2 = np.concatenate([p["bmu2"], p["bsg2"]], axis=1)           # (1, 2*OUT)

    # lane-pad every width to a multiple of 128 so all loads/matmuls/stores are
    # full-lane dense; zero rows/cols contribute exact zeros.
    D0p = _round_up(D0, 128)
    L0p = _round_up(L0, 128)
    L1p = _round_up(L1, 128)
    H2p = _round_up(2 * L2, 128)
    O2p = _round_up(2 * OUT, 128)

    weights = [w1, w2, wh1, wh2]
    biases = [b1, b2, bh1, bh2]
    k_pads = [D0p, L0p, L1p, H2p]
    n_pads = [L0p, L1p, H2p, O2p]
    ncols = max(n_pads)

    w_offsets = []
    row = 0
    for kp in k_pads:
        w_offsets.append(row)
        row += kp                      # multiples of 128 -> sublane aligned
    b_offset = row                     # all four biases share one 8-row tile
    total_rows = _round_up(row + len(biases), 8)

    buf = np.zeros((total_rows, ncols), np.float32)
    for off, w in zip(w_offsets, weights):
        buf[off:off + w.shape[0], :w.shape[1]] = w
    for k, b in enumerate(biases):
        buf[b_offset + k, :b.shape[1]] = b.reshape(-1)

    layout = {
        "dims": (D0, L0, L1, L2, OUT),
        "padded_dims": (D0p, L0p, L1p, H2p, O2p),
        "w_offsets": tuple(w_offsets),
        "b_offset": b_offset,
        "slab_shape": (total_rows, ncols),
    }
    return buf, layout


# -------------------------------- forward ------------------------------------
def make_vencoder_forward(layout, out_dim):
    kernel = _build_kernel(layout)
    D0 = layout["dims"][0]
    D0p, L0p, L1p, H2p, O2p = layout["padded_dims"]
    total_rows, ncols = layout["slab_shape"]

    def forward(x, p_buf):
        batch = x.shape[0]
        xp = x if D0 == D0p else jnp.pad(x, ((0, 0), (0, D0p - D0)))

        # --- VMEM budget guard (generation-aware, exact padded shapes) -------
        # Grid-less call: one resident VMEM buffer per operand, plus headroom for
        # compiler-managed activation temporaries (all <= ncols lanes wide).
        est_bytes = 4 * (batch * D0p          # padded x
                         + total_rows * ncols  # parameter slab
                         + batch * O2p         # output slab
                         + 6 * batch * ncols)  # activation temporaries
        try:
            vmem_cap = pltpu.get_tpu_info().vmem_capacity_bytes
        except Exception:
            vmem_cap = 64 << 20               # conservative fallback: v7x per-TC VMEM
        vmem_ceiling = (vmem_cap * 3) // 4    # leave headroom for Mosaic internals
        assert est_bytes <= vmem_ceiling, (
            "single-block VEncoder exceeds this generation's VMEM budget; "
            "switch to a batch-tiled grid with a global-BN-stats pre-pass.")
        vmem_limit = int(min(vmem_ceiling, max(4 << 20, 2 * est_bytes)))
        # TODO(synk): for batches too large for a single block, add a batch grid axis
        # with dimension_semantics=("parallel",) (v7x has 2 TensorCores), hoist the
        # BatchNorm statistics into a pre-pass so batch stats stay global, and compute
        # the per-tile BN sums on the MXU (ones(1,B) @ [h | h*h]) for large tiles.

        out = pl.pallas_call(
            kernel,
            out_shape=jax.ShapeDtypeStruct((batch, O2p), jnp.float32),
            in_specs=[pl.BlockSpec(memory_space=pltpu.MemorySpace.VMEM)] * 2,
            out_specs=pl.BlockSpec(memory_space=pltpu.MemorySpace.VMEM),
            compiler_params=pltpu.CompilerParams(vmem_limit_bytes=vmem_limit),
        )(xp, p_buf)
        return out[:, :out_dim], out[:, out_dim:2 * out_dim]

    return jax.jit(forward)


# ----------------------------- parameter setup -------------------------------
def _linear_init(key, fan_in, fan_out):
    """PyTorch-style uniform(-1/sqrt(fan_in), 1/sqrt(fan_in)); W stored as (in, out)."""
    kw, kb = jax.random.split(key)
    bound = 1.0 / np.sqrt(fan_in)
    w = jax.random.uniform(kw, (fan_in, fan_out), jnp.float32, -bound, bound)
    b = jax.random.uniform(kb, (1, fan_out), jnp.float32, -bound, bound)
    return w, b


def make_params(key, in_dim, latent_dims, out_dim):
    """latent_dims = [L0, L1, L2] matching the PyTorch constructor's latent_dim list."""
    dims = [in_dim] + list(latent_dims)  # [in_dim, L0, L1, L2]
    keys = jax.random.split(key, 8)
    p = {}
    # BN defaults: gamma=1, beta=0 (kept as (1, C) rows).
    p["g1"], p["be1"] = jnp.ones((1, dims[0]), jnp.float32), jnp.zeros((1, dims[0]), jnp.float32)
    p["w1"], p["b1"] = _linear_init(keys[0], dims[0], dims[1])
    p["g2"], p["be2"] = jnp.ones((1, dims[1]), jnp.float32), jnp.zeros((1, dims[1]), jnp.float32)
    p["w2"], p["b2"] = _linear_init(keys[1], dims[1], dims[2])

    p["gmu"], p["bemu"] = jnp.ones((1, dims[2]), jnp.float32), jnp.zeros((1, dims[2]), jnp.float32)
    p["wmu1"], p["bmu1"] = _linear_init(keys[2], dims[2], dims[3])
    p["wmu2"], p["bmu2"] = _linear_init(keys[3], dims[3], out_dim)

    p["gsg"], p["besg"] = jnp.ones((1, dims[2]), jnp.float32), jnp.zeros((1, dims[2]), jnp.float32)
    p["wsg1"], p["bsg1"] = _linear_init(keys[4], dims[2], dims[3])
    p["wsg2"], p["bsg2"] = _linear_init(keys[5], dims[3], out_dim)
    return p


# ----------------------------- pure-JAX reference ----------------------------
def _ref_forward(x, p):
    """Unfused reference mirroring the PyTorch module structure."""
    def bn(h, g, b):
        m = jnp.mean(h, axis=0, keepdims=True)
        v = jnp.mean((h - m) ** 2, axis=0, keepdims=True)
        return (h - m) / jnp.sqrt(v + BN_EPS) * g + b

    def lrelu(h):
        return jnp.where(h >= 0, h, NEG_SLOPE * h)

    h = lrelu(bn(x, p["g1"], p["be1"]) @ p["w1"] + p["b1"])
    h = lrelu(bn(h, p["g2"], p["be2"]) @ p["w2"] + p["b2"])
    hm = lrelu(bn(h, p["gmu"], p["bemu"]) @ p["wmu1"] + p["bmu1"])
    mu = hm @ p["wmu2"] + p["bmu2"]
    hs = lrelu(bn(h, p["gsg"], p["besg"]) @ p["wsg1"] + p["bsg1"])
    sigma = hs @ p["wsg2"] + p["bsg2"]
    return mu, sigma


# ----------------------------------- main ------------------------------------
if __name__ == "__main__":
    in_dim = 32
    latent_dims = [64, 32, 16]   # VEncoder(in_dim=32, latent_dim=[64,32,16], out_dim=8)
    out_dim = 8
    batch = 8

    key = jax.random.PRNGKey(0)
    kx, kp = jax.random.split(key)
    x = jax.random.normal(kx, (batch, in_dim), jnp.float32)
    params = make_params(kp, in_dim, latent_dims, out_dim)

    # one-time, host-side packing (outside jit)
    p_buf_np, layout = pack_params(params, in_dim, latent_dims, out_dim)
    p_buf = jnp.asarray(p_buf_np)

    fwd = make_vencoder_forward(layout, out_dim)
    mu, sigma = fwd(x, p_buf)
    jax.block_until_ready((mu, sigma))

    mu_ref, sigma_ref = _ref_forward(x, params)
    np.testing.assert_allclose(np.asarray(mu), np.asarray(mu_ref), rtol=1e-4, atol=1e-5)
    np.testing.assert_allclose(np.asarray(sigma), np.asarray(sigma_ref), rtol=1e-4, atol=1e-5)

    print("KERNEL_OK")
</pallas_src>

<mosaic_0001>
module attributes {stable_mosaic.version = 11 : i64} {
  func.func @kernel(%arg0: memref<8x128xf32, #tpu.memory_space<vmem>>, %arg1: memref<520x128xf32, #tpu.memory_space<vmem>>, %arg2: memref<8x128xf32, #tpu.memory_space<vmem>>) attributes {dimension_semantics = [], scalar_prefetch = 0 : i64, scratch_operands = 0 : i64, tpu.core_type = #tpu.core_type<tc>} {
    %c0 = arith.constant 0 : index
    %c0_0 = arith.constant 0 : index
    %0 = vector.load %arg0[%c0, %c0_0] : memref<8x128xf32, #tpu.memory_space<vmem>>, vector<8x128xf32>
    %cst = arith.constant dense<0.000000e+00> : vector<128xf32>
    %1 = vector.multi_reduction <add>, %0, %cst [0] : vector<8x128xf32> to vector<128xf32>
    %2 = vector.shape_cast %1 : vector<128xf32> to vector<1x128xf32>
    %3 = arith.mulf %0, %0 : vector<8x128xf32>
    %cst_1 = arith.constant dense<0.000000e+00> : vector<128xf32>
    %4 = vector.multi_reduction <add>, %3, %cst_1 [0] : vector<8x128xf32> to vector<128xf32>
    %5 = vector.shape_cast %4 : vector<128xf32> to vector<1x128xf32>
    %cst_2 = arith.constant 1.250000e-01 : f32
    %6 = vector.broadcast %cst_2 : f32 to vector<1x128xf32>
    %7 = arith.mulf %2, %6 : vector<1x128xf32>
    %cst_3 = arith.constant 1.250000e-01 : f32
    %8 = vector.broadcast %cst_3 : f32 to vector<1x128xf32>
    %9 = arith.mulf %5, %8 : vector<1x128xf32>
    %10 = arith.mulf %7, %7 : vector<1x128xf32>
    %11 = arith.subf %9, %10 : vector<1x128xf32>
    %cst_4 = arith.constant 0.000000e+00 : f32
    %12 = vector.broadcast %cst_4 : f32 to vector<1x128xf32>
    %13 = arith.maximumf %11, %12 : vector<1x128xf32>
    %14 = vector.broadcast %7 : vector<1x128xf32> to vector<8x128xf32>
    %15 = arith.subf %0, %14 : vector<8x128xf32>
    %cst_5 = arith.constant 9.99999974E-6 : f32
    %16 = vector.broadcast %cst_5 : f32 to vector<1x128xf32>
    %17 = arith.addf %13, %16 : vector<1x128xf32>
    %18 = math.rsqrt %17 : vector<1x128xf32>
    %19 = vector.broadcast %18 : vector<1x128xf32> to vector<8x128xf32>
    %20 = arith.mulf %15, %19 : vector<8x128xf32>
    %c0_6 = arith.constant 0 : index
    %c0_7 = arith.constant 0 : index
    %21 = vector.load %arg1[%c0_6, %c0_7] : memref<520x128xf32, #tpu.memory_space<vmem>>, vector<128x128xf32>
    %cst_8 = arith.constant dense<0.000000e+00> : vector<8x128xf32>
    %22 = tpu.matmul %20, %21, %cst_8 {dimension_numbers = #tpu.dot_dimension_numbers<[1], [0], [0], [1], [0, 0, 1, 1], [], []>} : vector<8x128xf32>, vector<128x128xf32>, vector<8x128xf32> -> vector<8x128xf32>
    %c512 = arith.constant 512 : index
    %c0_9 = arith.constant 0 : index
    %23 = vector.load %arg1[%c512, %c0_9] : memref<520x128xf32, #tpu.memory_space<vmem>>, vector<1x128xf32>
    %24 = vector.broadcast %23 : vector<1x128xf32> to vector<8x128xf32>
    %25 = arith.addf %22, %24 : vector<8x128xf32>
    %cst_10 = arith.constant 2.000000e-01 : f32
    %26 = vector.broadcast %cst_10 : f32 to vector<8x128xf32>
    %27 = arith.mulf %26, %25 : vector<8x128xf32>
    %28 = arith.maximumf %25, %27 : vector<8x128xf32>
    %cst_11 = arith.constant dense<0.000000e+00> : vector<128xf32>
    %29 = vector.multi_reduction <add>, %28, %cst_11 [0] : vector<8x128xf32> to vector<128xf32>
    %30 = vector.shape_cast %29 : vector<128xf32> to vector<1x128xf32>
    %31 = arith.mulf %28, %28 : vector<8x128xf32>
    %cst_12 = arith.constant dense<0.000000e+00> : vector<128xf32>
    %32 = vector.multi_reduction <add>, %31, %cst_12 [0] : vector<8x128xf32> to vector<128xf32>
    %33 = vector.shape_cast %32 : vector<128xf32> to vector<1x128xf32>
    %cst_13 = arith.constant 1.250000e-01 : f32
    %34 = vector.broadcast %cst_13 : f32 to vector<1x128xf32>
    %35 = arith.mulf %30, %34 : vector<1x128xf32>
    %cst_14 = arith.constant 1.250000e-01 : f32
    %36 = vector.broadcast %cst_14 : f32 to vector<1x128xf32>
    %37 = arith.mulf %33, %36 : vector<1x128xf32>
    %38 = arith.mulf %35, %35 : vector<1x128xf32>
    %39 = arith.subf %37, %38 : vector<1x128xf32>
    %cst_15 = arith.constant 0.000000e+00 : f32
    %40 = vector.broadcast %cst_15 : f32 to vector<1x128xf32>
    %41 = arith.maximumf %39, %40 : vector<1x128xf32>
    %42 = vector.broadcast %35 : vector<1x128xf32> to vector<8x128xf32>
    %43 = arith.subf %28, %42 : vector<8x128xf32>
    %cst_16 = arith.constant 9.99999974E-6 : f32
    %44 = vector.broadcast %cst_16 : f32 to vector<1x128xf32>
    %45 = arith.addf %41, %44 : vector<1x128xf32>
    %46 = math.rsqrt %45 : vector<1x128xf32>
    %47 = vector.broadcast %46 : vector<1x128xf32> to vector<8x128xf32>
    %48 = arith.mulf %43, %47 : vector<8x128xf32>
    %c128 = arith.constant 128 : index
    %c0_17 = arith.constant 0 : index
    %49 = vector.load %arg1[%c128, %c0_17] : memref<520x128xf32, #tpu.memory_space<vmem>>, vector<128x128xf32>
    %cst_18 = arith.constant dense<0.000000e+00> : vector<8x128xf32>
    %50 = tpu.matmul %48, %49, %cst_18 {dimension_numbers = #tpu.dot_dimension_numbers<[1], [0], [0], [1], [0, 0, 1, 1], [], []>} : vector<8x128xf32>, vector<128x128xf32>, vector<8x128xf32> -> vector<8x128xf32>
    %c513 = arith.constant 513 : index
    %c0_19 = arith.constant 0 : index
    %51 = vector.load %arg1[%c513, %c0_19] : memref<520x128xf32, #tpu.memory_space<vmem>>, vector<1x128xf32>
    %52 = vector.broadcast %51 : vector<1x128xf32> to vector<8x128xf32>
    %53 = arith.addf %50, %52 : vector<8x128xf32>
    %cst_20 = arith.constant 2.000000e-01 : f32
    %54 = vector.broadcast %cst_20 : f32 to vector<8x128xf32>
    %55 = arith.mulf %54, %53 : vector<8x128xf32>
    %56 = arith.maximumf %53, %55 : vector<8x128xf32>
    %cst_21 = arith.constant dense<0.000000e+00> : vector<128xf32>
    %57 = vector.multi_reduction <add>, %56, %cst_21 [0] : vector<8x128xf32> to vector<128xf32>
    %58 = vector.shape_cast %57 : vector<128xf32> to vector<1x128xf32>
    %59 = arith.mulf %56, %56 : vector<8x128xf32>
    %cst_22 = arith.constant dense<0.000000e+00> : vector<128xf32>
    %60 = vector.multi_reduction <add>, %59, %cst_22 [0] : vector<8x128xf32> to vector<128xf32>
    %61 = vector.shape_cast %60 : vector<128xf32> to vector<1x128xf32>
    %cst_23 = arith.constant 1.250000e-01 : f32
    %62 = vector.broadcast %cst_23 : f32 to vector<1x128xf32>
    %63 = arith.mulf %58, %62 : vector<1x128xf32>
    %cst_24 = arith.constant 1.250000e-01 : f32
    %64 = vector.broadcast %cst_24 : f32 to vector<1x128xf32>
    %65 = arith.mulf %61, %64 : vector<1x128xf32>
    %66 = arith.mulf %63, %63 : vector<1x128xf32>
    %67 = arith.subf %65, %66 : vector<1x128xf32>
    %cst_25 = arith.constant 0.000000e+00 : f32
    %68 = vector.broadcast %cst_25 : f32 to vector<1x128xf32>
    %69 = arith.maximumf %67, %68 : vector<1x128xf32>
    %70 = vector.broadcast %63 : vector<1x128xf32> to vector<8x128xf32>
    %71 = arith.subf %56, %70 : vector<8x128xf32>
    %cst_26 = arith.constant 9.99999974E-6 : f32
    %72 = vector.broadcast %cst_26 : f32 to vector<1x128xf32>
    %73 = arith.addf %69, %72 : vector<1x128xf32>
    %74 = math.rsqrt %73 : vector<1x128xf32>
    %75 = vector.broadcast %74 : vector<1x128xf32> to vector<8x128xf32>
    %76 = arith.mulf %71, %75 : vector<8x128xf32>
    %c256 = arith.constant 256 : index
    %c0_27 = arith.constant 0 : index
    %77 = vector.load %arg1[%c256, %c0_27] : memref<520x128xf32, #tpu.memory_space<vmem>>, vector<128x128xf32>
    %cst_28 = arith.constant dense<0.000000e+00> : vector<8x128xf32>
    %78 = tpu.matmul %76, %77, %cst_28 {dimension_numbers = #tpu.dot_dimension_numbers<[1], [0], [0], [1], [0, 0, 1, 1], [], []>} : vector<8x128xf32>, vector<128x128xf32>, vector<8x128xf32> -> vector<8x128xf32>
    %c514 = arith.constant 514 : index
    %c0_29 = arith.constant 0 : index
    %79 = vector.load %arg1[%c514, %c0_29] : memref<520x128xf32, #tpu.memory_space<vmem>>, vector<1x128xf32>
    %80 = vector.broadcast %79 : vector<1x128xf32> to vector<8x128xf32>
    %81 = arith.addf %78, %80 : vector<8x128xf32>
    %cst_30 = arith.constant 2.000000e-01 : f32
    %82 = vector.broadcast %cst_30 : f32 to vector<8x128xf32>
    %83 = arith.mulf %82, %81 : vector<8x128xf32>
    %84 = arith.maximumf %81, %83 : vector<8x128xf32>
    %c384 = arith.constant 384 : index
    %c0_31 = arith.constant 0 : index
    %85 = vector.load %arg1[%c384, %c0_31] : memref<520x128xf32, #tpu.memory_space<vmem>>, vector<128x128xf32>
    %cst_32 = arith.constant dense<0.000000e+00> : vector<8x128xf32>
    %86 = tpu.matmul %84, %85, %cst_32 {dimension_numbers = #tpu.dot_dimension_numbers<[1], [0], [0], [1], [0, 0, 1, 1], [], []>} : vector<8x128xf32>, vector<128x128xf32>, vector<8x128xf32> -> vector<8x128xf32>
    %c515 = arith.constant 515 : index
    %c0_33 = arith.constant 0 : index
    %87 = vector.load %arg1[%c515, %c0_33] : memref<520x128xf32, #tpu.memory_space<vmem>>, vector<1x128xf32>
    %88 = vector.broadcast %87 : vector<1x128xf32> to vector<8x128xf32>
    %89 = arith.addf %86, %88 : vector<8x128xf32>
    %c0_34 = arith.constant 0 : index
    %c0_35 = arith.constant 0 : index
    %90 = vector.load %arg2[%c0_34, %c0_35] : memref<8x128xf32, #tpu.memory_space<vmem>>, vector<8x128xf32>
    tpu.vector_store %arg2[%c0_34, %c0_35], %89 {strides = array<i32>} : memref<8x128xf32, #tpu.memory_space<vmem>>, vector<8x128xf32>,
    return
  }
}

</mosaic_0001>

<llo_original>
// kernel: forward.1
$region0: #{forward.1}
  #allocation0 [shape = 'u32[]', space=smem, size = 0x4, offset = 0x4, fixed_abs, tag = 'smem constant byte address 0x4 - core index']
  #allocation1 [shape = 'u32[144,128]{1,0:T(1,128)}', space=vmem, size = 0x12000, scoped, tag = 'internal scratch']
  %s0 = inlined_call_operand.vmem [shape: f32[8,128], index: 0, kind: input, shape index: {}]
  %s1 = inlined_call_operand.hbm [shape: f32[520,128], index: 1, kind: input, shape index: {}]
  %s2 = inlined_call_operand.vmem [shape: f32[8,128], index: 2, kind: output, shape index: {}]
  %s3 = sld [smem:[#allocation0]]
  $region22: #{forward.1} parent=0
    _
  %s5 = ssub.s32 1, %s3
  %s6 = scalar_select 0, %s5, %s3
  $region1: #{forward.1} parent=0
    #allocation2 [shape = 'u8[266240]{0}', space=vmem, size = 0x41000, scoped, tag = 'input window, operand 1, single buffered']
    #allocation3 [shape = 's32[1]{0}', space=sflag, size = 0x4, scoped, tag = 'scoped memory for forward.1']
    %7 = vsyncpa [#allocation3], 0
    // Predicated region
    $region2: #{forward.1} parent=1 // pred_check
      _
    $region3: #{forward.1} parent=1 // pred_check_branch
      %9 = sbr.rel (0) target = $region5
    $region4: #{forward.1} parent=1 // pred_region
      _
    $region5: #{forward.1} parent=1 // pred_fallthru
      _
    // Predicated region
    $region6: #{forward.1} parent=1 // pred_check
      _
    $region7: #{forward.1} parent=1 // pred_check_branch
      %11 = sbr.rel (0) target = $region9
    $region8: #{forward.1} parent=1 // pred_region
      %s13 = ssub.s32 8320, 8320
      %14 = vsyncadd [#allocation3], %s13
      %s15 = sshll.u32 [#allocation2], 4
      %s16 = int_to_ptr.vmem [resolvable:$true] %s15
      %21 = dma.hbm_to_vmem [thread:$0]  %s1, 8320, %s16, [#allocation3], 128, 128, 8
    $region9: #{forward.1} parent=1 // pred_fallthru
      _
    // Predicated region
    $region10: #{forward.1} parent=1 // pred_check
      _
    $region11: #{forward.1} parent=1 // pred_check_branch
      %23 = sbr.rel (0) target = $region13
    $region12: #{forward.1} parent=1 // pred_region
      %24 = dma.done [#allocation3], 8320
    $region13: #{forward.1} parent=1 // pred_fallthru
      _
    %v25 = vld [vmem:[%s0] sm:$0xff]
    %v26 = vrot.slane %v25, 4
    %v27 = vadd.f32 %v25, %v26
    %v28 = vrot.slane %v27, 2
    %v29 = vadd.f32 %v27, %v28
    %v30 = vrot.slane %v29, 1
    %v31 = vadd.f32 %v29, %v30
    %v32 = vmul.f32 %v25, %v25
    %v33 = vrot.slane %v32, 4
    %v34 = vadd.f32 %v32, %v33
    %v35 = vrot.slane %v34, 2
    %v36 = vadd.f32 %v34, %v35
    %v37 = vrot.slane %v36, 1
    %v38 = vadd.f32 %v36, %v37
    %v39 = vmul.f32 %v31, 0.125
    %v40 = vmul.f32 %v38, 0.125
    %v41 = vmul.f32 %v39, %v39
    %v42 = vsub.f32 %v40, %v41
    %v43 = vmax.f32 %v42, 0.0
    %v44 = vsub.f32 %v25, %v39
    %v45 = vadd.f32 %v43, 1e-05
    %v46 = vrsqrt.pop %v45
    %v47 = vmul.f32 %v44, %v46
    %v48 = vld [vmem:[#allocation2] sm:$0xff]
    %v49 = vld [vmem:[#allocation2 + $0x8] sm:$0xff]
    %v50 = vld [vmem:[#allocation2 + $0x10] sm:$0xff]
    %v51 = vld [vmem:[#allocation2 + $0x18] sm:$0xff]
    %v52 = vld [vmem:[#allocation2 + $0x20] sm:$0xff]
    %v53 = vld [vmem:[#allocation2 + $0x28] sm:$0xff]
    %v54 = vld [vmem:[#allocation2 + $0x30] sm:$0xff]
    %v55 = vld [vmem:[#allocation2 + $0x38] sm:$0xff]
    %v56 = vld [vmem:[#allocation2 + $0x40] sm:$0xff]
    %v57 = vld [vmem:[#allocation2 + $0x48] sm:$0xff]
    %v58 = vld [vmem:[#allocation2 + $0x50] sm:$0xff]
    %v59 = vld [vmem:[#allocation2 + $0x58] sm:$0xff]
    %v60 = vld [vmem:[#allocation2 + $0x60] sm:$0xff]
    %v61 = vld [vmem:[#allocation2 + $0x68] sm:$0xff]
    %v62 = vld [vmem:[#allocation2 + $0x70] sm:$0xff]
    %v63 = vld [vmem:[#allocation2 + $0x78] sm:$0xff]
    %v64 = vld [vmem:[#allocation2 + $0x200] sm:$0x1]
    %v65 = vlaneseq
    %v66 = vshrl.u32 %v65, 7
    %v67 = vsub.s32 0, %v66
    %v68 = vrot.slane %v64, %v67
    %69 = vmatprep.subr.mxu0 0.0
    %70 = vmatpush1.msra.mxu0 %v63
    %71 = vmatprep.subr.mxu0 0.0
    %72 = vmatpush1.msra.mxu0 %v62
    %73 = vmatprep.subr.mxu0 0.0
    %74 = vmatpush1.msra.mxu0 %v61
    %75 = vmatprep.subr.mxu0 0.0
    %76 = vmatpush1.msra.mxu0 %v60
    %77 = vmatprep.subr.mxu0 0.0
    %78 = vmatpush1.msra.mxu0 %v59
    %79 = vmatprep.subr.mxu0 0.0
    %80 = vmatpush1.msra.mxu0 %v58
    %81 = vmatprep.subr.mxu0 0.0
    %82 = vmatpush1.msra.mxu0 %v57
    %83 = vmatprep.subr.mxu0 0.0
    %84 = vmatpush1.msra.mxu0 %v56
    %85 = vmatprep.subr.mxu0 0.0
    %86 = vmatpush1.msra.mxu0 %v55
    %87 = vmatprep.subr.mxu0 0.0
    %88 = vmatpush1.msra.mxu0 %v54
    %89 = vmatprep.subr.mxu0 0.0
    %90 = vmatpush1.msra.mxu0 %v53
    %91 = vmatprep.subr.mxu0 0.0
    %92 = vmatpush1.msra.mxu0 %v52
    %93 = vmatprep.subr.mxu0 0.0
    %94 = vmatpush1.msra.mxu0 %v51
    %95 = vmatprep.subr.mxu0 0.0
    %96 = vmatpush1.msra.mxu0 %v50
    %97 = vmatprep.subr.mxu0 0.0
    %98 = vmatpush1.msra.mxu0 %v49
    %99 = vmatprep.subr.mxu0 0.0
    %100 = vmatpush1.msra.mxu0 %v48
    %101 = vmatprep.subr.mxu0 0.0
    %102 = vmatpush2.msra.mxu0 0.0
    %103 = vmatprep.subr.mxu0 0.0
    %104 = vmatpush2.msra.mxu0 0.0
    %105 = vmatprep.subr.mxu0 0.0
    %106 = vmatpush2.msra.mxu0 0.0
    %107 = vmatprep.subr.mxu0 0.0
    %108 = vmatpush2.msra.mxu0 0.0
    %109 = vmatprep.subr.mxu0 0.0
    %110 = vmatpush2.msra.mxu0 0.0
    %111 = vmatprep.subr.mxu0 0.0
    %112 = vmatpush2.msra.mxu0 0.0
    %113 = vmatprep.subr.mxu0 0.0
    %114 = vmatpush2.msra.mxu0 0.0
    %115 = vmatprep.subr.mxu0 0.0
    %116 = vmatpush2.msra.mxu0 0.0
    %117 = vmatprep.subr.mxu0 0.0
    %118 = vmatpush2.msra.mxu0 0.0
    %119 = vmatprep.subr.mxu0 0.0
    %120 = vmatpush2.msra.mxu0 0.0
    %121 = vmatprep.subr.mxu0 0.0
    %122 = vmatpush2.msra.mxu0 0.0
    %123 = vmatprep.subr.mxu0 0.0
    %124 = vmatpush2.msra.mxu0 0.0
    %125 = vmatprep.subr.mxu0 0.0
    %126 = vmatpush2.msra.mxu0 0.0
    %127 = vmatprep.subr.mxu0 0.0
    %128 = vmatpush2.msra.mxu0 0.0
    %129 = vmatprep.subr.mxu0 0.0
    %130 = vmatpush2.msra.mxu0 0.0
    %131 = vmatprep.subr.mxu0 0.0
    %132 = vmatpush2.msra.mxu0 0.0
    %133 = vmatprep.mubr.f32.mxu0 0.0
    %134 = vmatmul.mubr.f32.gmra.mxu0 %v47
    %v135 = vpop.f32.mrf.mxu0
    %v136 = vadd.f32 %v68, %v135
    %v137 = vpop.f32.mrf.mxu0
    %138 = vdwg.mxu0
    %v139 = vmul.f32 %v136, 0.2
    %v140 = vmax.f32 %v136, %v139
    %v141 = vrot.slane %v140, 4
    %v142 = vadd.f32 %v140, %v141
    %v143 = vrot.slane %v142, 2
    %v144 = vadd.f32 %v142, %v143
    %v145 = vrot.slane %v144, 1
    %v146 = vadd.f32 %v144, %v145
    %v147 = vmul.f32 %v140, %v140
    %v148 = vrot.slane %v147, 4
    %v149 = vadd.f32 %v147, %v148
    %v150 = vrot.slane %v149, 2
    %v151 = vadd.f32 %v149, %v150
    %v152 = vrot.slane %v151, 1
    %v153 = vadd.f32 %v151, %v152
    %v154 = vmul.f32 %v146, 0.125
    %v155 = vmul.f32 %v153, 0.125
    %v156 = vmul.f32 %v154, %v154
    %v157 = vsub.f32 %v155, %v156
    %v158 = vmax.f32 %v157, 0.0
    %v159 = vsub.f32 %v140, %v154
    %v160 = vadd.f32 %v158, 1e-05
    %v161 = vrsqrt.pop %v160
    %v162 = vmul.f32 %v159, %v161
    %v163 = vld [vmem:[#allocation2 + $0x80] sm:$0xff]
    %v164 = vld [vmem:[#allocation2 + $0x88] sm:$0xff]
    %v165 = vld [vmem:[#allocation2 + $0x90] sm:$0xff]
    %v166 = vld [vmem:[#allocation2 + $0x98] sm:$0xff]
    %v167 = vld [vmem:[#allocation2 + $0xa0] sm:$0xff]
    %v168 = vld [vmem:[#allocation2 + $0xa8] sm:$0xff]
    %v169 = vld [vmem:[#allocation2 + $0xb0] sm:$0xff]
    %v170 = vld [vmem:[#allocation2 + $0xb8] sm:$0xff]
    %v171 = vld [vmem:[#allocation2 + $0xc0] sm:$0xff]
    %v172 = vld [vmem:[#allocation2 + $0xc8] sm:$0xff]
    %v173 = vld [vmem:[#allocation2 + $0xd0] sm:$0xff]
    %v174 = vld [vmem:[#allocation2 + $0xd8] sm:$0xff]
    %v175 = vld [vmem:[#allocation2 + $0xe0] sm:$0xff]
    %v176 = vld [vmem:[#allocation2 + $0xe8] sm:$0xff]
    %v177 = vld [vmem:[#allocation2 + $0xf0] sm:$0xff]
    %v178 = vld [vmem:[#allocation2 + $0xf8] sm:$0xff]
    %v179 = vld [vmem:[#allocation2 + $0x201] sm:$0x1]
    %v180 = vlaneseq
    %v181 = vshrl.u32 %v180, 7
    %v182 = vsub.s32 0, %v181
    %v183 = vrot.slane %v179, %v182
    %184 = vmatprep.subr.mxu0 0.0
    %185 = vmatpush1.msra.mxu0 %v178
    %186 = vmatprep.subr.mxu0 0.0
    %187 = vmatpush1.msra.mxu0 %v177
    %188 = vmatprep.subr.mxu0 0.0
    %189 = vmatpush1.msra.mxu0 %v176
    %190 = vmatprep.subr.mxu0 0.0
    %191 = vmatpush1.msra.mxu0 %v175
    %192 = vmatprep.subr.mxu0 0.0
    %193 = vmatpush1.msra.mxu0 %v174
    %194 = vmatprep.subr.mxu0 0.0
    %195 = vmatpush1.msra.mxu0 %v173
    %196 = vmatprep.subr.mxu0 0.0
    %197 = vmatpush1.msra.mxu0 %v172
    %198 = vmatprep.subr.mxu0 0.0
    %199 = vmatpush1.msra.mxu0 %v171
    %200 = vmatprep.subr.mxu0 0.0
    %201 = vmatpush1.msra.mxu0 %v170
    %202 = vmatprep.subr.mxu0 0.0
    %203 = vmatpush1.msra.mxu0 %v169
    %204 = vmatprep.subr.mxu0 0.0
    %205 = vmatpush1.msra.mxu0 %v168
    %206 = vmatprep.subr.mxu0 0.0
    %207 = vmatpush1.msra.mxu0 %v167
    %208 = vmatprep.subr.mxu0 0.0
    %209 = vmatpush1.msra.mxu0 %v166
    %210 = vmatprep.subr.mxu0 0.0
    %211 = vmatpush1.msra.mxu0 %v165
    %212 = vmatprep.subr.mxu0 0.0
    %213 = vmatpush1.msra.mxu0 %v164
    %214 = vmatprep.subr.mxu0 0.0
    %215 = vmatpush1.msra.mxu0 %v163
    %216 = vmatprep.subr.mxu0 0.0
    %217 = vmatpush2.msra.mxu0 0.0
    %218 = vmatprep.subr.mxu0 0.0
    %219 = vmatpush2.msra.mxu0 0.0
    %220 = vmatprep.subr.mxu0 0.0
    %221 = vmatpush2.msra.mxu0 0.0
    %222 = vmatprep.subr.mxu0 0.0
    %223 = vmatpush2.msra.mxu0 0.0
    %224 = vmatprep.subr.mxu0 0.0
    %225 = vmatpush2.msra.mxu0 0.0
    %226 = vmatprep.subr.mxu0 0.0
    %227 = vmatpush2.msra.mxu0 0.0
    %228 = vmatprep.subr.mxu0 0.0
    %229 = vmatpush2.msra.mxu0 0.0
    %230 = vmatprep.subr.mxu0 0.0
    %231 = vmatpush2.msra.mxu0 0.0
    %232 = vmatprep.subr.mxu0 0.0
    %233 = vmatpush2.msra.mxu0 0.0
    %234 = vmatprep.subr.mxu0 0.0
    %235 = vmatpush2.msra.mxu0 0.0
    %236 = vmatprep.subr.mxu0 0.0
    %237 = vmatpush2.msra.mxu0 0.0
    %238 = vmatprep.subr.mxu0 0.0
    %239 = vmatpush2.msra.mxu0 0.0
    %240 = vmatprep.subr.mxu0 0.0
    %241 = vmatpush2.msra.mxu0 0.0
    %242 = vmatprep.subr.mxu0 0.0
    %243 = vmatpush2.msra.mxu0 0.0
    %244 = vmatprep.subr.mxu0 0.0
    %245 = vmatpush2.msra.mxu0 0.0
    %246 = vmatprep.subr.mxu0 0.0
    %247 = vmatpush2.msra.mxu0 0.0
    %248 = vmatprep.mubr.f32.mxu0 0.0
    %249 = vmatmul.mubr.f32.gmra.mxu0 %v162
    %v250 = vpop.f32.mrf.mxu0
    %v251 = vadd.f32 %v183, %v250
    %v252 = vpop.f32.mrf.mxu0
    %253 = vdwg.mxu0
    %v254 = vmul.f32 %v251, 0.2
    %v255 = vmax.f32 %v251, %v254
    %v256 = vrot.slane %v255, 4
    %v257 = vadd.f32 %v255, %v256
    %v258 = vrot.slane %v257, 2
    %v259 = vadd.f32 %v257, %v258
    %v260 = vrot.slane %v259, 1
    %v261 = vadd.f32 %v259, %v260
    %v262 = vmul.f32 %v255, %v255
    %v263 = vrot.slane %v262, 4
    %v264 = vadd.f32 %v262, %v263
    %v265 = vrot.slane %v264, 2
    %v266 = vadd.f32 %v264, %v265
    %v267 = vrot.slane %v266, 1
    %v268 = vadd.f32 %v266, %v267
    %v269 = vmul.f32 %v261, 0.125
    %v270 = vmul.f32 %v268, 0.125
    %v271 = vmul.f32 %v269, %v269
    %v272 = vsub.f32 %v270, %v271
    %v273 = vmax.f32 %v272, 0.0
    %v274 = vsub.f32 %v255, %v269
    %v275 = vadd.f32 %v273, 1e-05
    %v276 = vrsqrt.pop %v275
    %v277 = vmul.f32 %v274, %v276
    %v278 = vld [vmem:[#allocation2 + $0x100] sm:$0xff]
    %v279 = vld [vmem:[#allocation2 + $0x108] sm:$0xff]
    %v280 = vld [vmem:[#allocation2 + $0x110] sm:$0xff]
    %v281 = vld [vmem:[#allocation2 + $0x118] sm:$0xff]
    %v282 = vld [vmem:[#allocation2 + $0x120] sm:$0xff]
    %v283 = vld [vmem:[#allocation2 + $0x128] sm:$0xff]
    %v284 = vld [vmem:[#allocation2 + $0x130] sm:$0xff]
    %v285 = vld [vmem:[#allocation2 + $0x138] sm:$0xff]
    %v286 = vld [vmem:[#allocation2 + $0x140] sm:$0xff]
    %v287 = vld [vmem:[#allocation2 + $0x148] sm:$0xff]
    %v288 = vld [vmem:[#allocation2 + $0x150] sm:$0xff]
    %v289 = vld [vmem:[#allocation2 + $0x158] sm:$0xff]
    %v290 = vld [vmem:[#allocation2 + $0x160] sm:$0xff]
    %v291 = vld [vmem:[#allocation2 + $0x168] sm:$0xff]
    %v292 = vld [vmem:[#allocation2 + $0x170] sm:$0xff]
    %v293 = vld [vmem:[#allocation2 + $0x178] sm:$0xff]
    %v294 = vld [vmem:[#allocation2 + $0x202] sm:$0x1]
    %v295 = vlaneseq
    %v296 = vshrl.u32 %v295, 7
    %v297 = vsub.s32 0, %v296
    %v298 = vrot.slane %v294, %v297
    %299 = vmatprep.subr.mxu0 0.0
    %300 = vmatpush1.msra.mxu0 %v293
    %301 = vmatprep.subr.mxu0 0.0
    %302 = vmatpush1.msra.mxu0 %v292
    %303 = vmatprep.subr.mxu0 0.0
    %304 = vmatpush1.msra.mxu0 %v291
    %305 = vmatprep.subr.mxu0 0.0
    %306 = vmatpush1.msra.mxu0 %v290
    %307 = vmatprep.subr.mxu0 0.0
    %308 = vmatpush1.msra.mxu0 %v289
    %309 = vmatprep.subr.mxu0 0.0
    %310 = vmatpush1.msra.mxu0 %v288
    %311 = vmatprep.subr.mxu0 0.0
    %312 = vmatpush1.msra.mxu0 %v287
    %313 = vmatprep.subr.mxu0 0.0
    %314 = vmatpush1.msra.mxu0 %v286
    %315 = vmatprep.subr.mxu0 0.0
    %316 = vmatpush1.msra.mxu0 %v285
    %317 = vmatprep.subr.mxu0 0.0
    %318 = vmatpush1.msra.mxu0 %v284
    %319 = vmatprep.subr.mxu0 0.0
    %320 = vmatpush1.msra.mxu0 %v283
    %321 = vmatprep.subr.mxu0 0.0
    %322 = vmatpush1.msra.mxu0 %v282
    %323 = vmatprep.subr.mxu0 0.0
    %324 = vmatpush1.msra.mxu0 %v281
    %325 = vmatprep.subr.mxu0 0.0
    %326 = vmatpush1.msra.mxu0 %v280
    %327 = vmatprep.subr.mxu0 0.0
    %328 = vmatpush1.msra.mxu0 %v279
    %329 = vmatprep.subr.mxu0 0.0
    %330 = vmatpush1.msra.mxu0 %v278
    %331 = vmatprep.subr.mxu0 0.0
    %332 = vmatpush2.msra.mxu0 0.0
    %333 = vmatprep.subr.mxu0 0.0
    %334 = vmatpush2.msra.mxu0 0.0
    %335 = vmatprep.subr.mxu0 0.0
    %336 = vmatpush2.msra.mxu0 0.0
    %337 = vmatprep.subr.mxu0 0.0
    %338 = vmatpush2.msra.mxu0 0.0
    %339 = vmatprep.subr.mxu0 0.0
    %340 = vmatpush2.msra.mxu0 0.0
    %341 = vmatprep.subr.mxu0 0.0
    %342 = vmatpush2.msra.mxu0 0.0
    %343 = vmatprep.subr.mxu0 0.0
    %344 = vmatpush2.msra.mxu0 0.0
    %345 = vmatprep.subr.mxu0 0.0
    %346 = vmatpush2.msra.mxu0 0.0
    %347 = vmatprep.subr.mxu0 0.0
    %348 = vmatpush2.msra.mxu0 0.0
    %349 = vmatprep.subr.mxu0 0.0
    %350 = vmatpush2.msra.mxu0 0.0
    %351 = vmatprep.subr.mxu0 0.0
    %352 = vmatpush2.msra.mxu0 0.0
    %353 = vmatprep.subr.mxu0 0.0
    %354 = vmatpush2.msra.mxu0 0.0
    %355 = vmatprep.subr.mxu0 0.0
    %356 = vmatpush2.msra.mxu0 0.0
    %357 = vmatprep.subr.mxu0 0.0
    %358 = vmatpush2.msra.mxu0 0.0
    %359 = vmatprep.subr.mxu0 0.0
    %360 = vmatpush2.msra.mxu0 0.0
    %361 = vmatprep.subr.mxu0 0.0
    %362 = vmatpush2.msra.mxu0 0.0
    %363 = vmatprep.mubr.f32.mxu0 0.0
    %364 = vmatmul.mubr.f32.gmra.mxu0 %v277
    %v365 = vpop.f32.mrf.mxu0
    %v366 = vadd.f32 %v298, %v365
    %v367 = vpop.f32.mrf.mxu0
    %368 = vdwg.mxu0
    %v369 = vmul.f32 %v366, 0.2
    %v370 = vmax.f32 %v366, %v369
    %v371 = vld [vmem:[#allocation2 + $0x180] sm:$0xff]
    %v372 = vld [vmem:[#allocation2 + $0x188] sm:$0xff]
    %v373 = vld [vmem:[#allocation2 + $0x190] sm:$0xff]
    %v374 = vld [vmem:[#allocation2 + $0x198] sm:$0xff]
    %v375 = vld [vmem:[#allocation2 + $0x1a0] sm:$0xff]
    %v376 = vld [vmem:[#allocation2 + $0x1a8] sm:$0xff]
    %v377 = vld [vmem:[#allocation2 + $0x1b0] sm:$0xff]
    %v378 = vld [vmem:[#allocation2 + $0x1b8] sm:$0xff]
    %v379 = vld [vmem:[#allocation2 + $0x1c0] sm:$0xff]
    %v380 = vld [vmem:[#allocation2 + $0x1c8] sm:$0xff]
    %v381 = vld [vmem:[#allocation2 + $0x1d0] sm:$0xff]
    %v382 = vld [vmem:[#allocation2 + $0x1d8] sm:$0xff]
    %v383 = vld [vmem:[#allocation2 + $0x1e0] sm:$0xff]
    %v384 = vld [vmem:[#allocation2 + $0x1e8] sm:$0xff]
    %v385 = vld [vmem:[#allocation2 + $0x1f0] sm:$0xff]
    %v386 = vld [vmem:[#allocation2 + $0x1f8] sm:$0xff]
    %v387 = vld [vmem:[#allocation2 + $0x203] sm:$0x1]
    %v388 = vlaneseq
    %v389 = vshrl.u32 %v388, 7
    %v390 = vsub.s32 0, %v389
    %v391 = vrot.slane %v387, %v390
    %392 = vmatprep.subr.mxu0 0.0
    %393 = vmatpush1.msra.mxu0 %v386
    %394 = vmatprep.subr.mxu0 0.0
    %395 = vmatpush1.msra.mxu0 %v385
    %396 = vmatprep.subr.mxu0 0.0
    %397 = vmatpush1.msra.mxu0 %v384
    %398 = vmatprep.subr.mxu0 0.0
    %399 = vmatpush1.msra.mxu0 %v383
    %400 = vmatprep.subr.mxu0 0.0
    %401 = vmatpush1.msra.mxu0 %v382
    %402 = vmatprep.subr.mxu0 0.0
    %403 = vmatpush1.msra.mxu0 %v381
    %404 = vmatprep.subr.mxu0 0.0
    %405 = vmatpush1.msra.mxu0 %v380
    %406 = vmatprep.subr.mxu0 0.0
    %407 = vmatpush1.msra.mxu0 %v379
    %408 = vmatprep.subr.mxu0 0.0
    %409 = vmatpush1.msra.mxu0 %v378
    %410 = vmatprep.subr.mxu0 0.0
    %411 = vmatpush1.msra.mxu0 %v377
    %412 = vmatprep.subr.mxu0 0.0
    %413 = vmatpush1.msra.mxu0 %v376
    %414 = vmatprep.subr.mxu0 0.0
    %415 = vmatpush1.msra.mxu0 %v375
    %416 = vmatprep.subr.mxu0 0.0
    %417 = vmatpush1.msra.mxu0 %v374
    %418 = vmatprep.subr.mxu0 0.0
    %419 = vmatpush1.msra.mxu0 %v373
    %420 = vmatprep.subr.mxu0 0.0
    %421 = vmatpush1.msra.mxu0 %v372
    %422 = vmatprep.subr.mxu0 0.0
    %423 = vmatpush1.msra.mxu0 %v371
    %424 = vmatprep.subr.mxu0 0.0
    %425 = vmatpush2.msra.mxu0 0.0
    %426 = vmatprep.subr.mxu0 0.0
    %427 = vmatpush2.msra.mxu0 0.0
    %428 = vmatprep.subr.mxu0 0.0
    %429 = vmatpush2.msra.mxu0 0.0
    %430 = vmatprep.subr.mxu0 0.0
    %431 = vmatpush2.msra.mxu0 0.0
    %432 = vmatprep.subr.mxu0 0.0
    %433 = vmatpush2.msra.mxu0 0.0
    %434 = vmatprep.subr.mxu0 0.0
    %435 = vmatpush2.msra.mxu0 0.0
    %436 = vmatprep.subr.mxu0 0.0
    %437 = vmatpush2.msra.mxu0 0.0
    %438 = vmatprep.subr.mxu0 0.0
    %439 = vmatpush2.msra.mxu0 0.0
    %440 = vmatprep.subr.mxu0 0.0
    %441 = vmatpush2.msra.mxu0 0.0
    %442 = vmatprep.subr.mxu0 0.0
    %443 = vmatpush2.msra.mxu0 0.0
    %444 = vmatprep.subr.mxu0 0.0
    %445 = vmatpush2.msra.mxu0 0.0
    %446 = vmatprep.subr.mxu0 0.0
    %447 = vmatpush2.msra.mxu0 0.0
    %448 = vmatprep.subr.mxu0 0.0
    %449 = vmatpush2.msra.mxu0 0.0
    %450 = vmatprep.subr.mxu0 0.0
    %451 = vmatpush2.msra.mxu0 0.0
    %452 = vmatprep.subr.mxu0 0.0
    %453 = vmatpush2.msra.mxu0 0.0
    %454 = vmatprep.subr.mxu0 0.0
    %455 = vmatpush2.msra.mxu0 0.0
    %456 = vmatprep.mubr.f32.mxu0 0.0
    %457 = vmatmul.mubr.f32.gmra.mxu0 %v370
    %v458 = vpop.f32.mrf.mxu0
    %v459 = vadd.f32 %v391, %v458
    %v460 = vpop.f32.mrf.mxu0
    %461 = vdwg.mxu0
    %462 = vst [vmem:[%s2] sm:$0xff] %v459
    // Predicated region
    $region14: #{forward.1} parent=1 // pred_check
      _
    $region15: #{forward.1} parent=1 // pred_check_branch
      %464 = sbr.rel (0) target = $region17
    $region16: #{forward.1} parent=1 // pred_region
      _
    $region17: #{forward.1} parent=1 // pred_fallthru
      _
    // Predicated region
    $region18: #{forward.1} parent=1 // pred_check
      _
    $region19: #{forward.1} parent=1 // pred_check_branch
      %466 = sbr.rel (0) target = $region21
    $region20: #{forward.1} parent=1 // pred_region
      _
    $region21: #{forward.1} parent=1 // pred_fallthru
      _
    %467 = vsyncpa [#allocation3], 1

</llo_original>
